<compile_context>
chip_gen: v7x
topology: tpu7x:2x2x1
jax: 0.10.0
libtpu: 0.0.40
codegen_flags: <defaults>
</compile_context>

<pallas_src>
import jax
import jax.numpy as jnp
from jax.experimental import pallas as pl
from jax.experimental.pallas import tpu as pltpu


def _round_up(a, m):
    return (a + m - 1) // m * m


def _make_ffn_kernel(c_real):
    """Build the FFN kernel; c_real is the un-padded feature dim for LN stats."""
    inv_c = 1.0 / float(c_real)

    def kernel(x_ref, g_ref, beta_ref, w1_ref, b1_ref, w2_ref, b2_ref, o_ref):
        # ---- LayerNorm over the (lane) feature axis, f32 math ----
        # Padded lanes of x are zero, so sums over the padded width equal sums
        # over the real width; divide by the real C.
        x = x_ref[...].astype(jnp.float32)                    # (rt, C_pad)
        s1 = jnp.sum(x, axis=-1, keepdims=True)
        s2 = jnp.sum(x * x, axis=-1, keepdims=True)
        mean = s1 * inv_c
        var = jnp.maximum(s2 * inv_c - mean * mean, 0.0)
        xn = (x - mean) * jax.lax.rsqrt(var + 1e-5)
        # gamma/beta are zero on padded lanes -> padded lanes of xn become 0.
        xn = xn * g_ref[...] + beta_ref[...]                  # (rt, C_pad), f32

        # ---- Linear 1 (C -> H) on the MXU (bf16 operands, f32 accumulate) ----
        h = jnp.dot(xn.astype(jnp.bfloat16), w1_ref[...],
                    preferred_element_type=jnp.float32) + b1_ref[...]
        # Swish / SiLU in f32 (sigmoid goes to the EUP slot).
        h = h * jax.nn.sigmoid(h)

        # TODO(synk): dropout1/dropout2 are identity here (inference); training-mode
        # dropout would need pltpu.prng_seed + pltpu.stateful_bernoulli.
        # TODO(synk): for very large H (e.g. 2048) at row_tile=512, chunk the H axis
        # with an unrolled lax.fori_loop + VMEM accumulator to limit vreg pressure.

        # ---- Linear 2 (H -> C) ----
        y = jnp.dot(h.astype(jnp.bfloat16), w2_ref[...],
                    preferred_element_type=jnp.float32) + b2_ref[...]
        o_ref[...] = y.astype(o_ref.dtype)

    return kernel


def _pick_row_tile(row_tile, n_rows, c_pad, h_pad, io_bytes, vmem_budget_bytes):
    """Pick the largest row tile <= row_tile that fits the VMEM budget."""
    rt = min(row_tile, _round_up(max(n_rows, 1), 8))
    rt = max(_round_up(rt, 8), 8)

    def est(r):
        tiles = 2 * (2 * r * c_pad * io_bytes)          # double-buffered x + out tiles
        weights = 2 * c_pad * h_pad * 2                 # bf16 w1 + w2 (single buffered)
        vecs = (3 * c_pad + h_pad) * 4                  # gamma/beta/b1/b2
        live = r * h_pad * 4 + r * c_pad * 8            # f32 h + xn/y working set (approx)
        return tiles + weights + vecs + live

    while rt > 64 and est(rt) > vmem_budget_bytes:
        rt //= 2
    return rt


def feed_forward_module(x, gamma, beta, w1, b1, w2, b2, *,
                        row_tile=256, vmem_limit_bytes=48 * 1024 * 1024):
    """x: (T, B, C) -> (out (T, B, C), None)."""
    T, B, C = x.shape
    H = w1.shape[1]
    R = T * B

    # Lane-dense feature dims (multiples of 128); zero padding keeps math exact.
    C_pad = _round_up(C, 128)
    H_pad = _round_up(H, 128)

    io_bytes = jnp.dtype(x.dtype).itemsize
    rt = _pick_row_tile(row_tile, R, C_pad, H_pad, io_bytes,
                        (3 * vmem_limit_bytes) // 4)
    R_pad = _round_up(R, rt)
    grid = (R_pad // rt,)

    # Zero-pad inputs / params into the padded, 2-D, lane-major layout.
    x2 = jnp.zeros((R_pad, C_pad), x.dtype).at[:R, :C].set(x.reshape(R, C))
    gamma2 = jnp.zeros((1, C_pad), jnp.float32).at[0, :C].set(gamma.astype(jnp.float32))
    beta2 = jnp.zeros((1, C_pad), jnp.float32).at[0, :C].set(beta.astype(jnp.float32))
    w1p = jnp.zeros((C_pad, H_pad), jnp.bfloat16).at[:C, :H].set(w1.astype(jnp.bfloat16))
    b1p = jnp.zeros((1, H_pad), jnp.float32).at[0, :H].set(b1.astype(jnp.float32))
    w2p = jnp.zeros((H_pad, C_pad), jnp.bfloat16).at[:H, :C].set(w2.astype(jnp.bfloat16))
    b2p = jnp.zeros((1, C_pad), jnp.float32).at[0, :C].set(b2.astype(jnp.float32))

    kernel = _make_ffn_kernel(C)

    def _call(single_buffer_consts):
        def const_spec(shape):
            if single_buffer_consts:
                # Constant index_map -> no need for double buffering of weights.
                return pl.BlockSpec(shape, lambda i: (0, 0),
                                    pipeline_mode=pl.Buffered(1))
            return pl.BlockSpec(shape, lambda i: (0, 0))

        return pl.pallas_call(
            kernel,
            out_shape=jax.ShapeDtypeStruct((R_pad, C_pad), x.dtype),
            grid=grid,
            in_specs=[
                pl.BlockSpec((rt, C_pad), lambda i: (i, 0)),   # x rows
                const_spec((1, C_pad)),                        # ln gamma
                const_spec((1, C_pad)),                        # ln beta
                const_spec((C_pad, H_pad)),                    # w1 (bf16)
                const_spec((1, H_pad)),                        # b1
                const_spec((H_pad, C_pad)),                    # w2 (bf16)
                const_spec((1, C_pad)),                        # b2
            ],
            out_specs=pl.BlockSpec((rt, C_pad), lambda i: (i, 0)),
            compiler_params=pltpu.CompilerParams(
                dimension_semantics=("parallel",),             # megacore-shardable row axis
                vmem_limit_bytes=vmem_limit_bytes,
            ),
        )(x2, gamma2, beta2, w1p, b1p, w2p, b2p)

    try:
        out2 = _call(True)
    except Exception:
        # TODO(synk): pipeline_mode=pl.Buffered(1) unsupported on this jax build;
        # fall back to default (double-buffered) constant blocks.
        out2 = _call(False)

    return out2[:R, :C].reshape(T, B, C), None


def _reference(x, gamma, beta, w1, b1, w2, b2):
    xf = x.astype(jnp.float32)
    mean = jnp.mean(xf, axis=-1, keepdims=True)
    var = jnp.mean((xf - mean) ** 2, axis=-1, keepdims=True)
    xn = (xf - mean) * jax.lax.rsqrt(var + 1e-5) * gamma + beta
    h = xn @ w1 + b1
    h = h * jax.nn.sigmoid(h)
    return h @ w2 + b2


if __name__ == "__main__":
    key = jax.random.PRNGKey(0)
    T, B, C, H = 8, 2, 16, 32   # input_feat=16, hidden_units=32

    k = jax.random.split(key, 5)
    x = jax.random.normal(k[0], (T, B, C), dtype=jnp.float32)

    # deterministic parameter init (synthetic, not a checkpoint)
    gamma = jnp.ones((C,), jnp.float32)
    beta = jnp.zeros((C,), jnp.float32)
    w1 = jax.random.normal(k[1], (C, H), jnp.float32) * (1.0 / jnp.sqrt(C))
    b1 = jax.random.normal(k[2], (H,), jnp.float32) * 0.01
    w2 = jax.random.normal(k[3], (H, C), jnp.float32) * (1.0 / jnp.sqrt(H))
    b2 = jax.random.normal(k[4], (C,), jnp.float32) * 0.01

    out, aux = feed_forward_module(x, gamma, beta, w1, b1, w2, b2)
    out = jax.block_until_ready(out)

    ref = _reference(x, gamma, beta, w1, b1, w2, b2)
    assert aux is None
    assert out.shape == (T, B, C)
    # bf16 matmul operands (f32 accumulation, f32 LayerNorm/bias) -> looser tolerance.
    assert jnp.allclose(out, ref, atol=5e-2, rtol=5e-2), \
        float(jnp.max(jnp.abs(out - ref)))

    print("KERNEL_OK")
</pallas_src>

<mosaic_0001>
module attributes {stable_mosaic.version = 11 : i64} {
  func.func @kernel(%arg0: i32, %arg1: memref<16x128xf32, #tpu.memory_space<vmem>>, %arg2: memref<1x128xf32, #tpu.memory_space<vmem>>, %arg3: memref<1x128xf32, #tpu.memory_space<vmem>>, %arg4: memref<128x128xbf16, #tpu.memory_space<vmem>>, %arg5: memref<1x128xf32, #tpu.memory_space<vmem>>, %arg6: memref<128x128xbf16, #tpu.memory_space<vmem>>, %arg7: memref<1x128xf32, #tpu.memory_space<vmem>>, %arg8: memref<16x128xf32, #tpu.memory_space<vmem>>) attributes {dimension_semantics = [#tpu.dimension_semantics<parallel>], iteration_bounds = array<i64: 1>, scalar_prefetch = 0 : i64, scratch_operands = 0 : i64, tpu.core_type = #tpu.core_type<tc>, window_params = [{transform_indices = @transform_0, window_bounds = array<i64: 16, 128>}, {pipeline_mode = #tpu.pipeline_mode<synchronous>, transform_indices = @transform_1, window_bounds = array<i64: 1, 128>}, {pipeline_mode = #tpu.pipeline_mode<synchronous>, transform_indices = @transform_2, window_bounds = array<i64: 1, 128>}, {pipeline_mode = #tpu.pipeline_mode<synchronous>, transform_indices = @transform_3, window_bounds = array<i64: 128, 128>}, {pipeline_mode = #tpu.pipeline_mode<synchronous>, transform_indices = @transform_4, window_bounds = array<i64: 1, 128>}, {pipeline_mode = #tpu.pipeline_mode<synchronous>, transform_indices = @transform_5, window_bounds = array<i64: 128, 128>}, {pipeline_mode = #tpu.pipeline_mode<synchronous>, transform_indices = @transform_6, window_bounds = array<i64: 1, 128>}, {transform_indices = @transform_7, window_bounds = array<i64: 16, 128>}]} {
    %c0 = arith.constant 0 : index
    %c0_0 = arith.constant 0 : index
    %0 = vector.load %arg1[%c0, %c0_0] : memref<16x128xf32, #tpu.memory_space<vmem>>, vector<16x128xf32>
    %cst = arith.constant dense<0.000000e+00> : vector<16xf32>
    %1 = vector.multi_reduction <add>, %0, %cst [1] : vector<16x128xf32> to vector<16xf32>
    %2 = vector.shape_cast %1 : vector<16xf32> to vector<16x1xf32>
    %3 = arith.mulf %0, %0 : vector<16x128xf32>
    %cst_1 = arith.constant dense<0.000000e+00> : vector<16xf32>
    %4 = vector.multi_reduction <add>, %3, %cst_1 [1] : vector<16x128xf32> to vector<16xf32>
    %5 = vector.shape_cast %4 : vector<16xf32> to vector<16x1xf32>
    %cst_2 = arith.constant 6.250000e-02 : f32
    %6 = vector.broadcast %cst_2 : f32 to vector<16x1xf32>
    %7 = arith.mulf %2, %6 : vector<16x1xf32>
    %cst_3 = arith.constant 6.250000e-02 : f32
    %8 = vector.broadcast %cst_3 : f32 to vector<16x1xf32>
    %9 = arith.mulf %5, %8 : vector<16x1xf32>
    %10 = arith.mulf %7, %7 : vector<16x1xf32>
    %11 = arith.subf %9, %10 : vector<16x1xf32>
    %cst_4 = arith.constant 0.000000e+00 : f32
    %12 = vector.broadcast %cst_4 : f32 to vector<16x1xf32>
    %13 = arith.maximumf %11, %12 : vector<16x1xf32>
    %14 = vector.broadcast %7 : vector<16x1xf32> to vector<16x128xf32>
    %15 = arith.subf %0, %14 : vector<16x128xf32>
    %cst_5 = arith.constant 9.99999974E-6 : f32
    %16 = vector.broadcast %cst_5 : f32 to vector<16x1xf32>
    %17 = arith.addf %13, %16 : vector<16x1xf32>
    %18 = math.rsqrt %17 : vector<16x1xf32>
    %19 = vector.broadcast %18 : vector<16x1xf32> to vector<16x128xf32>
    %20 = arith.mulf %15, %19 : vector<16x128xf32>
    %c0_6 = arith.constant 0 : index
    %c0_7 = arith.constant 0 : index
    %21 = vector.load %arg2[%c0_6, %c0_7] : memref<1x128xf32, #tpu.memory_space<vmem>>, vector<1x128xf32>
    %22 = vector.broadcast %21 : vector<1x128xf32> to vector<16x128xf32>
    %23 = arith.mulf %20, %22 : vector<16x128xf32>
    %c0_8 = arith.constant 0 : index
    %c0_9 = arith.constant 0 : index
    %24 = vector.load %arg3[%c0_8, %c0_9] : memref<1x128xf32, #tpu.memory_space<vmem>>, vector<1x128xf32>
    %25 = vector.broadcast %24 : vector<1x128xf32> to vector<16x128xf32>
    %26 = arith.addf %23, %25 : vector<16x128xf32>
    %27 = arith.truncf %26 : vector<16x128xf32> to vector<16x128xbf16>
    %c0_10 = arith.constant 0 : index
    %c0_11 = arith.constant 0 : index
    %28 = vector.load %arg4[%c0_10, %c0_11] : memref<128x128xbf16, #tpu.memory_space<vmem>>, vector<128x128xbf16>
    %cst_12 = arith.constant dense<0.000000e+00> : vector<16x128xf32>
    %29 = tpu.matmul %27, %28, %cst_12 {dimension_numbers = #tpu.dot_dimension_numbers<[1], [0], [0], [1], [0, 0, 1, 1], [], []>} : vector<16x128xbf16>, vector<128x128xbf16>, vector<16x128xf32> -> vector<16x128xf32>
    %c0_13 = arith.constant 0 : index
    %c0_14 = arith.constant 0 : index
    %30 = vector.load %arg5[%c0_13, %c0_14] : memref<1x128xf32, #tpu.memory_space<vmem>>, vector<1x128xf32>
    %31 = vector.broadcast %30 : vector<1x128xf32> to vector<16x128xf32>
    %32 = arith.addf %29, %31 : vector<16x128xf32>
    %33 = arith.negf %32 : vector<16x128xf32>
    %34 = math.exp %33 : vector<16x128xf32>
    %cst_15 = arith.constant 1.000000e+00 : f32
    %35 = vector.broadcast %cst_15 : f32 to vector<16x128xf32>
    %36 = arith.addf %35, %34 : vector<16x128xf32>
    %37 = arith.divf %35, %36 : vector<16x128xf32>
    %38 = arith.mulf %32, %37 : vector<16x128xf32>
    %39 = arith.truncf %38 : vector<16x128xf32> to vector<16x128xbf16>
    %c0_16 = arith.constant 0 : index
    %c0_17 = arith.constant 0 : index
    %40 = vector.load %arg6[%c0_16, %c0_17] : memref<128x128xbf16, #tpu.memory_space<vmem>>, vector<128x128xbf16>
    %cst_18 = arith.constant dense<0.000000e+00> : vector<16x128xf32>
    %41 = tpu.matmul %39, %40, %cst_18 {dimension_numbers = #tpu.dot_dimension_numbers<[1], [0], [0], [1], [0, 0, 1, 1], [], []>} : vector<16x128xbf16>, vector<128x128xbf16>, vector<16x128xf32> -> vector<16x128xf32>
    %c0_19 = arith.constant 0 : index
    %c0_20 = arith.constant 0 : index
    %42 = vector.load %arg7[%c0_19, %c0_20] : memref<1x128xf32, #tpu.memory_space<vmem>>, vector<1x128xf32>
    %43 = vector.broadcast %42 : vector<1x128xf32> to vector<16x128xf32>
    %44 = arith.addf %41, %43 : vector<16x128xf32>
    %c0_21 = arith.constant 0 : index
    %c0_22 = arith.constant 0 : index
    %45 = vector.load %arg8[%c0_21, %c0_22] : memref<16x128xf32, #tpu.memory_space<vmem>>, vector<16x128xf32>
    tpu.vector_store %arg8[%c0_21, %c0_22], %44 {strides = array<i32>} : memref<16x128xf32, #tpu.memory_space<vmem>>, vector<16x128xf32>,
    return
  }
  func.func @transform_0(%arg0: i32) -> (i32, i32) {
    %c0_i32 = arith.constant 0 : i32
    %c0_i32_0 = arith.constant 0 : i32
    return %arg0, %c0_i32 : i32, i32
  }
  func.func @transform_1(%arg0: i32) -> (i32, i32) {
    %c0_i32 = arith.constant 0 : i32
    %c0_i32_0 = arith.constant 0 : i32
    %c0_i32_1 = arith.constant 0 : i32
    return %c0_i32, %c0_i32_0 : i32, i32
  }
  func.func @transform_2(%arg0: i32) -> (i32, i32) {
    %c0_i32 = arith.constant 0 : i32
    %c0_i32_0 = arith.constant 0 : i32
    %c0_i32_1 = arith.constant 0 : i32
    return %c0_i32, %c0_i32_0 : i32, i32
  }
  func.func @transform_3(%arg0: i32) -> (i32, i32) {
    %c0_i32 = arith.constant 0 : i32
    %c0_i32_0 = arith.constant 0 : i32
    %c0_i32_1 = arith.constant 0 : i32
    return %c0_i32, %c0_i32_0 : i32, i32
  }
  func.func @transform_4(%arg0: i32) -> (i32, i32) {
    %c0_i32 = arith.constant 0 : i32
    %c0_i32_0 = arith.constant 0 : i32
    %c0_i32_1 = arith.constant 0 : i32
    return %c0_i32, %c0_i32_0 : i32, i32
  }
  func.func @transform_5(%arg0: i32) -> (i32, i32) {
    %c0_i32 = arith.constant 0 : i32
    %c0_i32_0 = arith.constant 0 : i32
    %c0_i32_1 = arith.constant 0 : i32
    return %c0_i32, %c0_i32_0 : i32, i32
  }
  func.func @transform_6(%arg0: i32) -> (i32, i32) {
    %c0_i32 = arith.constant 0 : i32
    %c0_i32_0 = arith.constant 0 : i32
    %c0_i32_1 = arith.constant 0 : i32
    return %c0_i32, %c0_i32_0 : i32, i32
  }
  func.func @transform_7(%arg0: i32) -> (i32, i32) {
    %c0_i32 = arith.constant 0 : i32
    %c0_i32_0 = arith.constant 0 : i32
    return %arg0, %c0_i32 : i32, i32
  }
}

module attributes {stable_mosaic.version = 11 : i64} {
  func.func @kernel(%arg0: i32, %arg1: memref<16x128xf32, #tpu.memory_space<vmem>>, %arg2: memref<1x128xf32, #tpu.memory_space<vmem>>, %arg3: memref<1x128xf32, #tpu.memory_space<vmem>>, %arg4: memref<128x128xbf16, #tpu.memory_space<vmem>>, %arg5: memref<1x128xf32, #tpu.memory_space<vmem>>, %arg6: memref<128x128xbf16, #tpu.memory_space<vmem>>, %arg7: memref<1x128xf32, #tpu.memory_space<vmem>>, %arg8: memref<16x128xf32, #tpu.memory_space<vmem>>) attributes {dimension_semantics = [#tpu.dimension_semantics<parallel>], iteration_bounds = array<i64: 1>, scalar_prefetch = 0 : i64, scratch_operands = 0 : i64, tpu.core_type = #tpu.core_type<tc>, window_params = [{transform_indices = @transform_0, window_bounds = array<i64: 16, 128>}, {pipeline_mode = #tpu.pipeline_mode<synchronous>, transform_indices = @transform_1, window_bounds = array<i64: 1, 128>}, {pipeline_mode = #tpu.pipeline_mode<synchronous>, transform_indices = @transform_2, window_bounds = array<i64: 1, 128>}, {pipeline_mode = #tpu.pipeline_mode<synchronous>, transform_indices = @transform_3, window_bounds = array<i64: 128, 128>}, {pipeline_mode = #tpu.pipeline_mode<synchronous>, transform_indices = @transform_4, window_bounds = array<i64: 1, 128>}, {pipeline_mode = #tpu.pipeline_mode<synchronous>, transform_indices = @transform_5, window_bounds = array<i64: 128, 128>}, {pipeline_mode = #tpu.pipeline_mode<synchronous>, transform_indices = @transform_6, window_bounds = array<i64: 1, 128>}, {transform_indices = @transform_7, window_bounds = array<i64: 16, 128>}]} {
    %c0 = arith.constant 0 : index
    %c0_0 = arith.constant 0 : index
    %0 = vector.load %arg1[%c0, %c0_0] : memref<16x128xf32, #tpu.memory_space<vmem>>, vector<16x128xf32>
    %cst = arith.constant dense<0.000000e+00> : vector<16xf32>
    %1 = vector.multi_reduction <add>, %0, %cst [1] : vector<16x128xf32> to vector<16xf32>
    %2 = vector.shape_cast %1 : vector<16xf32> to vector<16x1xf32>
    %3 = arith.mulf %0, %0 : vector<16x128xf32>
    %cst_1 = arith.constant dense<0.000000e+00> : vector<16xf32>
    %4 = vector.multi_reduction <add>, %3, %cst_1 [1] : vector<16x128xf32> to vector<16xf32>
    %5 = vector.shape_cast %4 : vector<16xf32> to vector<16x1xf32>
    %cst_2 = arith.constant 6.250000e-02 : f32
    %6 = vector.broadcast %cst_2 : f32 to vector<16x1xf32>
    %7 = arith.mulf %2, %6 : vector<16x1xf32>
    %cst_3 = arith.constant 6.250000e-02 : f32
    %8 = vector.broadcast %cst_3 : f32 to vector<16x1xf32>
    %9 = arith.mulf %5, %8 : vector<16x1xf32>
    %10 = arith.mulf %7, %7 : vector<16x1xf32>
    %11 = arith.subf %9, %10 : vector<16x1xf32>
    %cst_4 = arith.constant 0.000000e+00 : f32
    %12 = vector.broadcast %cst_4 : f32 to vector<16x1xf32>
    %13 = arith.maximumf %11, %12 : vector<16x1xf32>
    %14 = vector.broadcast %7 : vector<16x1xf32> to vector<16x128xf32>
    %15 = arith.subf %0, %14 : vector<16x128xf32>
    %cst_5 = arith.constant 9.99999974E-6 : f32
    %16 = vector.broadcast %cst_5 : f32 to vector<16x1xf32>
    %17 = arith.addf %13, %16 : vector<16x1xf32>
    %18 = math.rsqrt %17 : vector<16x1xf32>
    %19 = vector.broadcast %18 : vector<16x1xf32> to vector<16x128xf32>
    %20 = arith.mulf %15, %19 : vector<16x128xf32>
    %c0_6 = arith.constant 0 : index
    %c0_7 = arith.constant 0 : index
    %21 = vector.load %arg2[%c0_6, %c0_7] : memref<1x128xf32, #tpu.memory_space<vmem>>, vector<1x128xf32>
    %22 = vector.broadcast %21 : vector<1x128xf32> to vector<16x128xf32>
    %23 = arith.mulf %20, %22 : vector<16x128xf32>
    %c0_8 = arith.constant 0 : index
    %c0_9 = arith.constant 0 : index
    %24 = vector.load %arg3[%c0_8, %c0_9] : memref<1x128xf32, #tpu.memory_space<vmem>>, vector<1x128xf32>
    %25 = vector.broadcast %24 : vector<1x128xf32> to vector<16x128xf32>
    %26 = arith.addf %23, %25 : vector<16x128xf32>
    %27 = arith.truncf %26 : vector<16x128xf32> to vector<16x128xbf16>
    %c0_10 = arith.constant 0 : index
    %c0_11 = arith.constant 0 : index
    %28 = vector.load %arg4[%c0_10, %c0_11] : memref<128x128xbf16, #tpu.memory_space<vmem>>, vector<128x128xbf16>
    %cst_12 = arith.constant dense<0.000000e+00> : vector<16x128xf32>
    %29 = tpu.matmul %27, %28, %cst_12 {dimension_numbers = #tpu.dot_dimension_numbers<[1], [0], [0], [1], [0, 0, 1, 1], [], []>} : vector<16x128xbf16>, vector<128x128xbf16>, vector<16x128xf32> -> vector<16x128xf32>
    %c0_13 = arith.constant 0 : index
    %c0_14 = arith.constant 0 : index
    %30 = vector.load %arg5[%c0_13, %c0_14] : memref<1x128xf32, #tpu.memory_space<vmem>>, vector<1x128xf32>
    %31 = vector.broadcast %30 : vector<1x128xf32> to vector<16x128xf32>
    %32 = arith.addf %29, %31 : vector<16x128xf32>
    %33 = arith.negf %32 : vector<16x128xf32>
    %34 = math.exp %33 : vector<16x128xf32>
    %cst_15 = arith.constant 1.000000e+00 : f32
    %35 = vector.broadcast %cst_15 : f32 to vector<16x128xf32>
    %36 = arith.addf %35, %34 : vector<16x128xf32>
    %37 = arith.divf %35, %36 : vector<16x128xf32>
    %38 = arith.mulf %32, %37 : vector<16x128xf32>
    %39 = arith.truncf %38 : vector<16x128xf32> to vector<16x128xbf16>
    %c0_16 = arith.constant 0 : index
    %c0_17 = arith.constant 0 : index
    %40 = vector.load %arg6[%c0_16, %c0_17] : memref<128x128xbf16, #tpu.memory_space<vmem>>, vector<128x128xbf16>
    %cst_18 = arith.constant dense<0.000000e+00> : vector<16x128xf32>
    %41 = tpu.matmul %39, %40, %cst_18 {dimension_numbers = #tpu.dot_dimension_numbers<[1], [0], [0], [1], [0, 0, 1, 1], [], []>} : vector<16x128xbf16>, vector<128x128xbf16>, vector<16x128xf32> -> vector<16x128xf32>
    %c0_19 = arith.constant 0 : index
    %c0_20 = arith.constant 0 : index
    %42 = vector.load %arg7[%c0_19, %c0_20] : memref<1x128xf32, #tpu.memory_space<vmem>>, vector<1x128xf32>
    %43 = vector.broadcast %42 : vector<1x128xf32> to vector<16x128xf32>
    %44 = arith.addf %41, %43 : vector<16x128xf32>
    %c0_21 = arith.constant 0 : index
    %c0_22 = arith.constant 0 : index
    %45 = vector.load %arg8[%c0_21, %c0_22] : memref<16x128xf32, #tpu.memory_space<vmem>>, vector<16x128xf32>
    tpu.vector_store %arg8[%c0_21, %c0_22], %44 {strides = array<i32>} : memref<16x128xf32, #tpu.memory_space<vmem>>, vector<16x128xf32>,
    return
  }
  func.func @transform_0(%arg0: i32) -> (i32, i32) {
    %c0_i32 = arith.constant 0 : i32
    %c0_i32_0 = arith.constant 0 : i32
    return %arg0, %c0_i32 : i32, i32
  }
  func.func @transform_1(%arg0: i32) -> (i32, i32) {
    %c0_i32 = arith.constant 0 : i32
    %c0_i32_0 = arith.constant 0 : i32
    %c0_i32_1 = arith.constant 0 : i32
    return %c0_i32, %c0_i32_0 : i32, i32
  }
  func.func @transform_2(%arg0: i32) -> (i32, i32) {
    %c0_i32 = arith.constant 0 : i32
    %c0_i32_0 = arith.constant 0 : i32
    %c0_i32_1 = arith.constant 0 : i32
    return %c0_i32, %c0_i32_0 : i32, i32
  }
  func.func @transform_3(%arg0: i32) -> (i32, i32) {
    %c0_i32 = arith.constant 0 : i32
    %c0_i32_0 = arith.constant 0 : i32
    %c0_i32_1 = arith.constant 0 : i32
    return %c0_i32, %c0_i32_0 : i32, i32
  }
  func.func @transform_4(%arg0: i32) -> (i32, i32) {
    %c0_i32 = arith.constant 0 : i32
    %c0_i32_0 = arith.constant 0 : i32
    %c0_i32_1 = arith.constant 0 : i32
    return %c0_i32, %c0_i32_0 : i32, i32
  }
  func.func @transform_5(%arg0: i32) -> (i32, i32) {
    %c0_i32 = arith.constant 0 : i32
    %c0_i32_0 = arith.constant 0 : i32
    %c0_i32_1 = arith.constant 0 : i32
    return %c0_i32, %c0_i32_0 : i32, i32
  }
  func.func @transform_6(%arg0: i32) -> (i32, i32) {
    %c0_i32 = arith.constant 0 : i32
    %c0_i32_0 = arith.constant 0 : i32
    %c0_i32_1 = arith.constant 0 : i32
    return %c0_i32, %c0_i32_0 : i32, i32
  }
  func.func @transform_7(%arg0: i32) -> (i32, i32) {
    %c0_i32 = arith.constant 0 : i32
    %c0_i32_0 = arith.constant 0 : i32
    return %arg0, %c0_i32 : i32, i32
  }
}

</mosaic_0001>

<llo_original>
// kernel: tpu_custom_call.1
$region0: #{tpu_custom_call.1}
  #allocation0 [shape = 'u32[]', space=smem, size = 0x4, offset = 0x4, fixed_abs, tag = 'smem constant byte address 0x4 - core index']
  #allocation1 [shape = 'u32[144,128]{1,0:T(1,128)}', space=vmem, size = 0x12000, scoped, tag = 'internal scratch']
  %s0 = inlined_call_operand.hbm [shape: f32[16,128], index: 0, kind: input, shape index: {}]
  %s1 = inlined_call_operand.vmem [shape: f32[1,128], index: 1, kind: input, shape index: {}]
  %s2 = inlined_call_operand.vmem [shape: f32[1,128], index: 2, kind: input, shape index: {}]
  %s3 = inlined_call_operand.hbm [shape: bf16[128,128], index: 3, kind: input, shape index: {}]
  %s4 = inlined_call_operand.vmem [shape: f32[1,128], index: 4, kind: input, shape index: {}]
  %s5 = inlined_call_operand.hbm [shape: bf16[128,128], index: 5, kind: input, shape index: {}]
  %s6 = inlined_call_operand.vmem [shape: f32[1,128], index: 6, kind: input, shape index: {}]
  %s7 = inlined_call_operand.hbm [shape: f32[16,128], index: 7, kind: output, shape index: {}]
  %s8 = sld [smem:[#allocation0]]
  $region50: #{tpu_custom_call.1} parent=0
    _
  %s10 = ssub.s32 1, %s8
  %s11 = scalar_select 0, %s10, %s8
  $region1: #{tpu_custom_call.1} parent=0
    #allocation2 [shape = 'u8[8192]{0}', space=vmem, size = 0x2000, scoped, tag = 'input window, operand 0, single buffered']
    #allocation3 [shape = 's32[1]{0}', space=sflag, size = 0x4, scoped, tag = 'scoped memory for tpu_custom_call.1']
    #allocation4 [shape = 's32[1]{0}', space=sflag, size = 0x4, scoped, tag = 'scoped memory for tpu_custom_call.1']
    #allocation5 [shape = 'u8[32768]{0}', space=vmem, size = 0x8000, scoped, tag = 'input window, operand 3, single buffered']
    #allocation6 [shape = 's32[1]{0}', space=sflag, size = 0x4, scoped, tag = 'scoped memory for tpu_custom_call.1']
    #allocation7 [shape = 'u8[32768]{0}', space=vmem, size = 0x8000, scoped, tag = 'input window, operand 5, single buffered']
    #allocation8 [shape = 'u8[8192]{0}', space=vmem, size = 0x2000, scoped, tag = 'output window, operand 0, single buffered']
    %12 = vsyncpa [#allocation3], 0
    %13 = vsyncpa [#allocation6], 0
    %14 = vsyncpa [#allocation4], 0
    // Predicated region
    $region2: #{tpu_custom_call.1} parent=1 // pred_check
      _
    $region3: #{tpu_custom_call.1} parent=1 // pred_check_branch
      %16 = sbr.rel (0) target = $region5
    $region4: #{tpu_custom_call.1} parent=1 // pred_region
      %s18 = ssub.s32 256, 256
      %19 = vsyncadd [#allocation3], %s18
      %s20 = sshll.u32 [#allocation2], 4
      %s21 = int_to_ptr.vmem [resolvable:$true] %s20
      %26 = dma.hbm_to_vmem [thread:$0]  %s0, 256, %s21, [#allocation3], 128, 128, 8
    $region5: #{tpu_custom_call.1} parent=1 // pred_fallthru
      _
    // Predicated region
    $region6: #{tpu_custom_call.1} parent=1 // pred_check
      _
    $region7: #{tpu_custom_call.1} parent=1 // pred_check_branch
      %28 = sbr.rel (0) target = $region9
    $region8: #{tpu_custom_call.1} parent=1 // pred_region
      _
    $region9: #{tpu_custom_call.1} parent=1 // pred_fallthru
      _
    // Predicated region
    $region10: #{tpu_custom_call.1} parent=1 // pred_check
      _
    $region11: #{tpu_custom_call.1} parent=1 // pred_check_branch
      %30 = sbr.rel (0) target = $region13
    $region12: #{tpu_custom_call.1} parent=1 // pred_region
      _
    $region13: #{tpu_custom_call.1} parent=1 // pred_fallthru
      _
    // Predicated region
    $region14: #{tpu_custom_call.1} parent=1 // pred_check
      _
    $region15: #{tpu_custom_call.1} parent=1 // pred_check_branch
      %32 = sbr.rel (0) target = $region17
    $region16: #{tpu_custom_call.1} parent=1 // pred_region
      %s34 = ssub.s32 1024, 1024
      %35 = vsyncadd [#allocation6], %s34
      %s36 = sshll.u32 [#allocation5], 4
      %s37 = int_to_ptr.vmem [resolvable:$true] %s36
      %42 = dma.hbm_to_vmem [thread:$0]  %s3, 1024, %s37, [#allocation6], 64, 64, 4
    $region17: #{tpu_custom_call.1} parent=1 // pred_fallthru
      _
    // Predicated region
    $region18: #{tpu_custom_call.1} parent=1 // pred_check
      _
    $region19: #{tpu_custom_call.1} parent=1 // pred_check_branch
      %44 = sbr.rel (0) target = $region21
    $region20: #{tpu_custom_call.1} parent=1 // pred_region
      _
    $region21: #{tpu_custom_call.1} parent=1 // pred_fallthru
      _
    // Predicated region
    $region22: #{tpu_custom_call.1} parent=1 // pred_check
      _
    $region23: #{tpu_custom_call.1} parent=1 // pred_check_branch
      %46 = sbr.rel (0) target = $region25
    $region24: #{tpu_custom_call.1} parent=1 // pred_region
      %s48 = ssub.s32 1024, 1024
      %49 = vsyncadd [#allocation6], %s48
      %s50 = sshll.u32 [#allocation7], 4
      %s51 = int_to_ptr.vmem [resolvable:$true] %s50
      %56 = dma.hbm_to_vmem [thread:$0]  %s5, 1024, %s51, [#allocation6], 64, 64, 4
    $region25: #{tpu_custom_call.1} parent=1 // pred_fallthru
      _
    // Predicated region
    $region26: #{tpu_custom_call.1} parent=1 // pred_check
      _
    $region27: #{tpu_custom_call.1} parent=1 // pred_check_branch
      %58 = sbr.rel (0) target = $region29
    $region28: #{tpu_custom_call.1} parent=1 // pred_region
      _
    $region29: #{tpu_custom_call.1} parent=1 // pred_fallthru
      _
    // Predicated region
    $region30: #{tpu_custom_call.1} parent=1 // pred_check
      _
    $region31: #{tpu_custom_call.1} parent=1 // pred_check_branch
      %60 = sbr.rel (0) target = $region33
    $region32: #{tpu_custom_call.1} parent=1 // pred_region
      %61 = dma.done [#allocation3], 256
    $region33: #{tpu_custom_call.1} parent=1 // pred_fallthru
      _
    // Predicated region
    $region34: #{tpu_custom_call.1} parent=1 // pred_check
      _
    $region35: #{tpu_custom_call.1} parent=1 // pred_check_branch
      %63 = sbr.rel (0) target = $region37
    $region36: #{tpu_custom_call.1} parent=1 // pred_region
      %64 = dma.done [#allocation6], 1024
    $region37: #{tpu_custom_call.1} parent=1 // pred_fallthru
      _
    // Predicated region
    $region38: #{tpu_custom_call.1} parent=1 // pred_check
      _
    $region39: #{tpu_custom_call.1} parent=1 // pred_check_branch
      %66 = sbr.rel (0) target = $region41
    $region40: #{tpu_custom_call.1} parent=1 // pred_region
      %67 = dma.done [#allocation6], 1024
    $region41: #{tpu_custom_call.1} parent=1 // pred_fallthru
      _
    %v69 = vld [vmem:[#allocation2] sm:$0xff]
    %v70 = vld [vmem:[#allocation2 + $0x8] sm:$0xff]
    %71 = vadd.xlane.f32.xlu0 %v69
    %v72 = vpop.xlane.xlu0 %71
    %73 = vadd.xlane.f32.xlu0 %v70
    %v74 = vpop.xlane.xlu0 %73
    %v75 = vmul.f32 %v69, %v69
    %v76 = vmul.f32 %v70, %v70
    %77 = vadd.xlane.f32.xlu0 %v75
    %v78 = vpop.xlane.xlu0 %77
    %79 = vadd.xlane.f32.xlu0 %v76
    %v80 = vpop.xlane.xlu0 %79
    %v81 = vmul.f32 %v72, 0.0625
    %v82 = vmul.f32 %v74, 0.0625
    %v83 = vmul.f32 %v78, 0.0625
    %v84 = vmul.f32 %v80, 0.0625
    %v85 = vmul.f32 %v81, %v81
    %v86 = vmul.f32 %v82, %v82
    %v87 = vsub.f32 %v83, %v85
    %v88 = vsub.f32 %v84, %v86
    %v89 = vmax.f32 %v87, 0.0
    %v90 = vmax.f32 %v88, 0.0
    %v91 = vsub.f32 %v69, %v81
    %v92 = vsub.f32 %v70, %v82
    %v93 = vadd.f32 %v89, 1e-05
    %v94 = vadd.f32 %v90, 1e-05
    %v95 = vrsqrt.pop %v93
    %v96 = vrsqrt.pop %v94
    %v97 = vmul.f32 %v91, %v95
    %v98 = vmul.f32 %v92, %v96
    %v99 = vld [vmem:[%s1] sm:$0x1]
    %v101 = vlaneseq
    %v102 = vshrl.u32 %v101, 7
    %v103 = vsub.s32 0, %v102
    %v104 = vrot.slane %v99, %v103
    %v106 = vmul.f32 %v97, %v104
    %v107 = vmul.f32 %v98, %v104
    %v108 = vld [vmem:[%s2] sm:$0x1]
    %v110 = vlaneseq
    %v111 = vshrl.u32 %v110, 7
    %v112 = vsub.s32 0, %v111
    %v113 = vrot.slane %v108, %v112
    %v115 = vadd.f32 %v106, %v113
    %v116 = vadd.f32 %v107, %v113
    %v117 = vpack.c.bf16 %v116, %v115
    %v118 = vld [vmem:[#allocation5] sm:$0xf]
    %v119 = vld [vmem:[#allocation5 + $0x4] sm:$0xf]
    %v120 = vld [vmem:[#allocation5 + $0x8] sm:$0xf]
    %v121 = vld [vmem:[#allocation5 + $0xc] sm:$0xf]
    %v122 = vld [vmem:[#allocation5 + $0x10] sm:$0xf]
    %v123 = vld [vmem:[#allocation5 + $0x14] sm:$0xf]
    %v124 = vld [vmem:[#allocation5 + $0x18] sm:$0xf]
    %v125 = vld [vmem:[#allocation5 + $0x1c] sm:$0xf]
    %v126 = vld [vmem:[#allocation5 + $0x20] sm:$0xf]
    %v127 = vld [vmem:[#allocation5 + $0x24] sm:$0xf]
    %v128 = vld [vmem:[#allocation5 + $0x28] sm:$0xf]
    %v129 = vld [vmem:[#allocation5 + $0x2c] sm:$0xf]
    %v130 = vld [vmem:[#allocation5 + $0x30] sm:$0xf]
    %v131 = vld [vmem:[#allocation5 + $0x34] sm:$0xf]
    %v132 = vld [vmem:[#allocation5 + $0x38] sm:$0xf]
    %v133 = vld [vmem:[#allocation5 + $0x3c] sm:$0xf]
    %v134 = vld [vmem:[%s4] sm:$0x1]
    %v136 = vlaneseq
    %v137 = vshrl.u32 %v136, 7
    %v138 = vsub.s32 0, %v137
    %v139 = vrot.slane %v134, %v138
    %v157 = vunpack.c.l.b16 %v118
    %v158 = vunpack.c.l.b16 %v119
    %v159 = vunpack.c.l.b16 %v120
    %v160 = vunpack.c.l.b16 %v121
    %v161 = vunpack.c.l.b16 %v122
    %v162 = vunpack.c.l.b16 %v123
    %v163 = vunpack.c.l.b16 %v124
    %v164 = vunpack.c.l.b16 %v125
    %v165 = vunpack.c.l.b16 %v126
    %v166 = vunpack.c.l.b16 %v127
    %v167 = vunpack.c.l.b16 %v128
    %v168 = vunpack.c.l.b16 %v129
    %v169 = vunpack.c.l.b16 %v130
    %v170 = vunpack.c.l.b16 %v131
    %v171 = vunpack.c.l.b16 %v132
    %v172 = vunpack.c.l.b16 %v133
    %v173 = vpack.c.b16 %v158, %v157
    %v174 = vpack.c.b16 %v160, %v159
    %v175 = vpack.c.b16 %v162, %v161
    %v176 = vpack.c.b16 %v164, %v163
    %v177 = vpack.c.b16 %v166, %v165
    %v178 = vpack.c.b16 %v168, %v167
    %v179 = vpack.c.b16 %v170, %v169
    %v180 = vpack.c.b16 %v172, %v171
    %189 = vmatprep.subr.bf16.mxu0 0
    %190 = vmatpush1.bf16.msra.mxu0 %v173
    %191 = vmatprep.subr.bf16.mxu0 0
    %192 = vmatpush1.bf16.msra.mxu0 %v174
    %193 = vmatprep.subr.bf16.mxu0 0
    %194 = vmatpush1.bf16.msra.mxu0 %v175
    %195 = vmatprep.subr.bf16.mxu0 0
    %196 = vmatpush1.bf16.msra.mxu0 %v176
    %197 = vmatprep.subr.bf16.mxu0 0
    %198 = vmatpush1.bf16.msra.mxu0 %v177
    %199 = vmatprep.subr.bf16.mxu0 0
    %200 = vmatpush1.bf16.msra.mxu0 %v178
    %201 = vmatprep.subr.bf16.mxu0 0
    %202 = vmatpush1.bf16.msra.mxu0 %v179
    %203 = vmatprep.subr.bf16.mxu0 0
    %204 = vmatpush1.bf16.msra.mxu0 %v180
    %205 = vmatprep.subr.bf16.mxu0 0
    %206 = vmatpush1.bf16.msra.mxu0 0
    %207 = vmatprep.subr.bf16.mxu0 0
    %208 = vmatpush1.bf16.msra.mxu0 0
    %209 = vmatprep.subr.bf16.mxu0 0
    %210 = vmatpush1.bf16.msra.mxu0 0
    %211 = vmatprep.subr.bf16.mxu0 0
    %212 = vmatpush1.bf16.msra.mxu0 0
    %213 = vmatprep.subr.bf16.mxu0 0
    %214 = vmatpush1.bf16.msra.mxu0 0
    %215 = vmatprep.subr.bf16.mxu0 0
    %216 = vmatpush1.bf16.msra.mxu0 0
    %217 = vmatprep.subr.bf16.mxu0 0
    %218 = vmatpush1.bf16.msra.mxu0 0
    %219 = vmatprep.subr.bf16.mxu0 0
    %220 = vmatpush1.bf16.msra.mxu0 0
    %221 = vmatprep.mubr.bf16.mxu0 0
    %222 = vmatmul.mubr.bf16.gmra.mrb[0].mxu0 %v117
    %v223 = vpop.f32.mrb[0].mxu0
    %v224 = vadd.f32 %v139, %v223
    %v225 = vpop.f32.mrb[0].mxu0
    %v226 = vpop.f32.mrb[0].mxu0
    %v227 = vadd.f32 %v139, %v226
    %v228 = vpop.f32.mrb[0].mxu0
    %229 = vdwg.mxu0
    %v230 = vxor.u32 %v224, 2147483648
    %v231 = vxor.u32 %v227, 2147483648
    %v232 = vmul.f32 %v230, 1.442695
    %v233 = vpow.pop %v232
    %v234 = vmul.f32 %v231, 1.442695
    %v235 = vpow.pop %v234
    %v236 = vadd.f32 %v233, 1.0
    %v237 = vadd.f32 %v235, 1.0
    %v238 = vrcp.pop %v236
    %v239 = vmul.f32 1.0, %v238
    %v240 = vrcp.pop %v237
    %v241 = vmul.f32 1.0, %v240
    %v242 = vmul.f32 %v224, %v239
    %v243 = vmul.f32 %v227, %v241
    %v244 = vpack.c.bf16 %v243, %v242
    %v245 = vld [vmem:[#allocation7] sm:$0xf]
    %v246 = vld [vmem:[#allocation7 + $0x4] sm:$0xf]
    %v247 = vld [vmem:[#allocation7 + $0x8] sm:$0xf]
    %v248 = vld [vmem:[#allocation7 + $0xc] sm:$0xf]
    %v249 = vld [vmem:[#allocation7 + $0x10] sm:$0xf]
    %v250 = vld [vmem:[#allocation7 + $0x14] sm:$0xf]
    %v251 = vld [vmem:[#allocation7 + $0x18] sm:$0xf]
    %v252 = vld [vmem:[#allocation7 + $0x1c] sm:$0xf]
    %v253 = vld [vmem:[#allocation7 + $0x20] sm:$0xf]
    %v254 = vld [vmem:[#allocation7 + $0x24] sm:$0xf]
    %v255 = vld [vmem:[#allocation7 + $0x28] sm:$0xf]
    %v256 = vld [vmem:[#allocation7 + $0x2c] sm:$0xf]
    %v257 = vld [vmem:[#allocation7 + $0x30] sm:$0xf]
    %v258 = vld [vmem:[#allocation7 + $0x34] sm:$0xf]
    %v259 = vld [vmem:[#allocation7 + $0x38] sm:$0xf]
    %v260 = vld [vmem:[#allocation7 + $0x3c] sm:$0xf]
    %v261 = vld [vmem:[%s6] sm:$0x1]
    %v263 = vlaneseq
    %v264 = vshrl.u32 %v263, 7
    %v265 = vsub.s32 0, %v264
    %v266 = vrot.slane %v261, %v265
    %v284 = vunpack.c.l.b16 %v245
    %v285 = vunpack.c.l.b16 %v246
    %v286 = vunpack.c.l.b16 %v247
    %v287 = vunpack.c.l.b16 %v248
    %v288 = vunpack.c.l.b16 %v249
    %v289 = vunpack.c.l.b16 %v250
    %v290 = vunpack.c.l.b16 %v251
    %v291 = vunpack.c.l.b16 %v252
    %v292 = vunpack.c.l.b16 %v253
    %v293 = vunpack.c.l.b16 %v254
    %v294 = vunpack.c.l.b16 %v255
    %v295 = vunpack.c.l.b16 %v256
    %v296 = vunpack.c.l.b16 %v257
    %v297 = vunpack.c.l.b16 %v258
    %v298 = vunpack.c.l.b16 %v259
    %v299 = vunpack.c.l.b16 %v260
    %v300 = vpack.c.b16 %v285, %v284
    %v301 = vpack.c.b16 %v287, %v286
    %v302 = vpack.c.b16 %v289, %v288
    %v303 = vpack.c.b16 %v291, %v290
    %v304 = vpack.c.b16 %v293, %v292
    %v305 = vpack.c.b16 %v295, %v294
    %v306 = vpack.c.b16 %v297, %v296
    %v307 = vpack.c.b16 %v299, %v298
    %316 = vmatprep.subr.bf16.mxu0 0
    %317 = vmatpush1.bf16.msra.mxu0 %v300
    %318 = vmatprep.subr.bf16.mxu0 0
    %319 = vmatpush1.bf16.msra.mxu0 %v301
    %320 = vmatprep.subr.bf16.mxu0 0
    %321 = vmatpush1.bf16.msra.mxu0 %v302
    %322 = vmatprep.subr.bf16.mxu0 0
    %323 = vmatpush1.bf16.msra.mxu0 %v303
    %324 = vmatprep.subr.bf16.mxu0 0
    %325 = vmatpush1.bf16.msra.mxu0 %v304
    %326 = vmatprep.subr.bf16.mxu0 0
    %327 = vmatpush1.bf16.msra.mxu0 %v305
    %328 = vmatprep.subr.bf16.mxu0 0
    %329 = vmatpush1.bf16.msra.mxu0 %v306
    %330 = vmatprep.subr.bf16.mxu0 0
    %331 = vmatpush1.bf16.msra.mxu0 %v307
    %332 = vmatprep.subr.bf16.mxu0 0
    %333 = vmatpush1.bf16.msra.mxu0 0
    %334 = vmatprep.subr.bf16.mxu0 0
    %335 = vmatpush1.bf16.msra.mxu0 0
    %336 = vmatprep.subr.bf16.mxu0 0
    %337 = vmatpush1.bf16.msra.mxu0 0
    %338 = vmatprep.subr.bf16.mxu0 0
    %339 = vmatpush1.bf16.msra.mxu0 0
    %340 = vmatprep.subr.bf16.mxu0 0
    %341 = vmatpush1.bf16.msra.mxu0 0
    %342 = vmatprep.subr.bf16.mxu0 0
    %343 = vmatpush1.bf16.msra.mxu0 0
    %344 = vmatprep.subr.bf16.mxu0 0
    %345 = vmatpush1.bf16.msra.mxu0 0
    %346 = vmatprep.subr.bf16.mxu0 0
    %347 = vmatpush1.bf16.msra.mxu0 0
    %348 = vmatprep.mubr.bf16.mxu0 0
    %349 = vmatmul.mubr.bf16.gmra.mrb[0].mxu0 %v244
    %v350 = vpop.f32.mrb[0].mxu0
    %v351 = vadd.f32 %v266, %v350
    %v352 = vpop.f32.mrb[0].mxu0
    %v353 = vpop.f32.mrb[0].mxu0
    %v354 = vadd.f32 %v266, %v353
    %v355 = vpop.f32.mrb[0].mxu0
    %356 = vdwg.mxu0
    %357 = vst [vmem:[#allocation8] sm:$0xff] %v351
    %358 = vst [vmem:[#allocation8 + $0x8] sm:$0xff] %v354
    // Predicated region
    $region42: #{tpu_custom_call.1} parent=1 // pred_check
      _
    $region43: #{tpu_custom_call.1} parent=1 // pred_check_branch
      %360 = sbr.rel (0) target = $region45
    $region44: #{tpu_custom_call.1} parent=1 // pred_region
      %s362 = ssub.s32 256, 256
      %363 = vsyncadd [#allocation4], %s362
      %s364 = sshll.u32 [#allocation8], 4
      %s365 = int_to_ptr.vmem [resolvable:$true] %s364
      %370 = dma.vmem_to_hbm [thread:$0]  %s365, 256, %s7, [#allocation4], 128, 128, 8
    $region45: #{tpu_custom_call.1} parent=1 // pred_fallthru
      _
    // Predicated region
    $region46: #{tpu_custom_call.1} parent=1 // pred_check
      _
    $region47: #{tpu_custom_call.1} parent=1 // pred_check_branch
      %372 = sbr.rel (0) target = $region49
    $region48: #{tpu_custom_call.1} parent=1 // pred_region
      %373 = dma.done [#allocation4], 256
    $region49: #{tpu_custom_call.1} parent=1 // pred_fallthru
      _
    %374 = vsyncpa [#allocation3], 1
    %375 = vsyncpa [#allocation6], 1
    %376 = vsyncpa [#allocation4], 1

// kernel: tpu_custom_call.1
$region0: #{tpu_custom_call.1}
  #allocation0 [shape = 'u32[]', space=smem, size = 0x4, offset = 0x4, fixed_abs, tag = 'smem constant byte address 0x4 - core index']
  #allocation1 [shape = 'u32[144,128]{1,0:T(1,128)}', space=vmem, size = 0x12000, scoped, tag = 'internal scratch']
  %s0 = inlined_call_operand.hbm [shape: f32[16,128], index: 0, kind: input, shape index: {}]
  %s1 = inlined_call_operand.vmem [shape: f32[1,128], index: 1, kind: input, shape index: {}]
  %s2 = inlined_call_operand.vmem [shape: f32[1,128], index: 2, kind: input, shape index: {}]
  %s3 = inlined_call_operand.hbm [shape: bf16[128,128], index: 3, kind: input, shape index: {}]
  %s4 = inlined_call_operand.vmem [shape: f32[1,128], index: 4, kind: input, shape index: {}]
  %s5 = inlined_call_operand.hbm [shape: bf16[128,128], index: 5, kind: input, shape index: {}]
  %s6 = inlined_call_operand.vmem [shape: f32[1,128], index: 6, kind: input, shape index: {}]
  %s7 = inlined_call_operand.hbm [shape: f32[16,128], index: 7, kind: output, shape index: {}]
  %s8 = sld [smem:[#allocation0]]
  $region50: #{tpu_custom_call.1} parent=0
    _
  %s10 = ssub.s32 1, %s8
  %s11 = scalar_select 0, %s10, %s8
  $region1: #{tpu_custom_call.1} parent=0
    #allocation2 [shape = 'u8[8192]{0}', space=vmem, size = 0x2000, scoped, tag = 'input window, operand 0, single buffered']
    #allocation3 [shape = 's32[1]{0}', space=sflag, size = 0x4, scoped, tag = 'scoped memory for tpu_custom_call.1']
    #allocation4 [shape = 's32[1]{0}', space=sflag, size = 0x4, scoped, tag = 'scoped memory for tpu_custom_call.1']
    #allocation5 [shape = 'u8[32768]{0}', space=vmem, size = 0x8000, scoped, tag = 'input window, operand 3, single buffered']
    #allocation6 [shape = 's32[1]{0}', space=sflag, size = 0x4, scoped, tag = 'scoped memory for tpu_custom_call.1']
    #allocation7 [shape = 'u8[32768]{0}', space=vmem, size = 0x8000, scoped, tag = 'input window, operand 5, single buffered']
    #allocation8 [shape = 'u8[8192]{0}', space=vmem, size = 0x2000, scoped, tag = 'output window, operand 0, single buffered']
    %12 = vsyncpa [#allocation3], 0
    %13 = vsyncpa [#allocation6], 0
    %14 = vsyncpa [#allocation4], 0
    // Predicated region
    $region2: #{tpu_custom_call.1} parent=1 // pred_check
      _
    $region3: #{tpu_custom_call.1} parent=1 // pred_check_branch
      %16 = sbr.rel (0) target = $region5
    $region4: #{tpu_custom_call.1} parent=1 // pred_region
      %s18 = ssub.s32 256, 256
      %19 = vsyncadd [#allocation3], %s18
      %s20 = sshll.u32 [#allocation2], 4
      %s21 = int_to_ptr.vmem [resolvable:$true] %s20
      %26 = dma.hbm_to_vmem [thread:$0]  %s0, 256, %s21, [#allocation3], 128, 128, 8
    $region5: #{tpu_custom_call.1} parent=1 // pred_fallthru
      _
    // Predicated region
    $region6: #{tpu_custom_call.1} parent=1 // pred_check
      _
    $region7: #{tpu_custom_call.1} parent=1 // pred_check_branch
      %28 = sbr.rel (0) target = $region9
    $region8: #{tpu_custom_call.1} parent=1 // pred_region
      _
    $region9: #{tpu_custom_call.1} parent=1 // pred_fallthru
      _
    // Predicated region
    $region10: #{tpu_custom_call.1} parent=1 // pred_check
      _
    $region11: #{tpu_custom_call.1} parent=1 // pred_check_branch
      %30 = sbr.rel (0) target = $region13
    $region12: #{tpu_custom_call.1} parent=1 // pred_region
      _
    $region13: #{tpu_custom_call.1} parent=1 // pred_fallthru
      _
    // Predicated region
    $region14: #{tpu_custom_call.1} parent=1 // pred_check
      _
    $region15: #{tpu_custom_call.1} parent=1 // pred_check_branch
      %32 = sbr.rel (0) target = $region17
    $region16: #{tpu_custom_call.1} parent=1 // pred_region
      %s34 = ssub.s32 1024, 1024
      %35 = vsyncadd [#allocation6], %s34
      %s36 = sshll.u32 [#allocation5], 4
      %s37 = int_to_ptr.vmem [resolvable:$true] %s36
      %42 = dma.hbm_to_vmem [thread:$0]  %s3, 1024, %s37, [#allocation6], 64, 64, 4
    $region17: #{tpu_custom_call.1} parent=1 // pred_fallthru
      _
    // Predicated region
    $region18: #{tpu_custom_call.1} parent=1 // pred_check
      _
    $region19: #{tpu_custom_call.1} parent=1 // pred_check_branch
      %44 = sbr.rel (0) target = $region21
    $region20: #{tpu_custom_call.1} parent=1 // pred_region
      _
    $region21: #{tpu_custom_call.1} parent=1 // pred_fallthru
      _
    // Predicated region
    $region22: #{tpu_custom_call.1} parent=1 // pred_check
      _
    $region23: #{tpu_custom_call.1} parent=1 // pred_check_branch
      %46 = sbr.rel (0) target = $region25
    $region24: #{tpu_custom_call.1} parent=1 // pred_region
      %s48 = ssub.s32 1024, 1024
      %49 = vsyncadd [#allocation6], %s48
      %s50 = sshll.u32 [#allocation7], 4
      %s51 = int_to_ptr.vmem [resolvable:$true] %s50
      %56 = dma.hbm_to_vmem [thread:$0]  %s5, 1024, %s51, [#allocation6], 64, 64, 4
    $region25: #{tpu_custom_call.1} parent=1 // pred_fallthru
      _
    // Predicated region
    $region26: #{tpu_custom_call.1} parent=1 // pred_check
      _
    $region27: #{tpu_custom_call.1} parent=1 // pred_check_branch
      %58 = sbr.rel (0) target = $region29
    $region28: #{tpu_custom_call.1} parent=1 // pred_region
      _
    $region29: #{tpu_custom_call.1} parent=1 // pred_fallthru
      _
    // Predicated region
    $region30: #{tpu_custom_call.1} parent=1 // pred_check
      _
    $region31: #{tpu_custom_call.1} parent=1 // pred_check_branch
      %60 = sbr.rel (0) target = $region33
    $region32: #{tpu_custom_call.1} parent=1 // pred_region
      %61 = dma.done [#allocation3], 256
    $region33: #{tpu_custom_call.1} parent=1 // pred_fallthru
      _
    // Predicated region
    $region34: #{tpu_custom_call.1} parent=1 // pred_check
      _
    $region35: #{tpu_custom_call.1} parent=1 // pred_check_branch
      %63 = sbr.rel (0) target = $region37
    $region36: #{tpu_custom_call.1} parent=1 // pred_region
      %64 = dma.done [#allocation6], 1024
    $region37: #{tpu_custom_call.1} parent=1 // pred_fallthru
      _
    // Predicated region
    $region38: #{tpu_custom_call.1} parent=1 // pred_check
      _
    $region39: #{tpu_custom_call.1} parent=1 // pred_check_branch
      %66 = sbr.rel (0) target = $region41
    $region40: #{tpu_custom_call.1} parent=1 // pred_region
      %67 = dma.done [#allocation6], 1024
    $region41: #{tpu_custom_call.1} parent=1 // pred_fallthru
      _
    %v69 = vld [vmem:[#allocation2] sm:$0xff]
    %v70 = vld [vmem:[#allocation2 + $0x8] sm:$0xff]
    %71 = vadd.xlane.f32.xlu0 %v69
    %v72 = vpop.xlane.xlu0 %71
    %73 = vadd.xlane.f32.xlu0 %v70
    %v74 = vpop.xlane.xlu0 %73
    %v75 = vmul.f32 %v69, %v69
    %v76 = vmul.f32 %v70, %v70
    %77 = vadd.xlane.f32.xlu0 %v75
    %v78 = vpop.xlane.xlu0 %77
    %79 = vadd.xlane.f32.xlu0 %v76
    %v80 = vpop.xlane.xlu0 %79
    %v81 = vmul.f32 %v72, 0.0625
    %v82 = vmul.f32 %v74, 0.0625
    %v83 = vmul.f32 %v78, 0.0625
    %v84 = vmul.f32 %v80, 0.0625
    %v85 = vmul.f32 %v81, %v81
    %v86 = vmul.f32 %v82, %v82
    %v87 = vsub.f32 %v83, %v85
    %v88 = vsub.f32 %v84, %v86
    %v89 = vmax.f32 %v87, 0.0
    %v90 = vmax.f32 %v88, 0.0
    %v91 = vsub.f32 %v69, %v81
    %v92 = vsub.f32 %v70, %v82
    %v93 = vadd.f32 %v89, 1e-05
    %v94 = vadd.f32 %v90, 1e-05
    %v95 = vrsqrt.pop %v93
    %v96 = vrsqrt.pop %v94
    %v97 = vmul.f32 %v91, %v95
    %v98 = vmul.f32 %v92, %v96
    %v99 = vld [vmem:[%s1] sm:$0x1]
    %v101 = vlaneseq
    %v102 = vshrl.u32 %v101, 7
    %v103 = vsub.s32 0, %v102
    %v104 = vrot.slane %v99, %v103
    %v106 = vmul.f32 %v97, %v104
    %v107 = vmul.f32 %v98, %v104
    %v108 = vld [vmem:[%s2] sm:$0x1]
    %v110 = vlaneseq
    %v111 = vshrl.u32 %v110, 7
    %v112 = vsub.s32 0, %v111
    %v113 = vrot.slane %v108, %v112
    %v115 = vadd.f32 %v106, %v113
    %v116 = vadd.f32 %v107, %v113
    %v117 = vpack.c.bf16 %v116, %v115
    %v118 = vld [vmem:[#allocation5] sm:$0xf]
    %v119 = vld [vmem:[#allocation5 + $0x4] sm:$0xf]
    %v120 = vld [vmem:[#allocation5 + $0x8] sm:$0xf]
    %v121 = vld [vmem:[#allocation5 + $0xc] sm:$0xf]
    %v122 = vld [vmem:[#allocation5 + $0x10] sm:$0xf]
    %v123 = vld [vmem:[#allocation5 + $0x14] sm:$0xf]
    %v124 = vld [vmem:[#allocation5 + $0x18] sm:$0xf]
    %v125 = vld [vmem:[#allocation5 + $0x1c] sm:$0xf]
    %v126 = vld [vmem:[#allocation5 + $0x20] sm:$0xf]
    %v127 = vld [vmem:[#allocation5 + $0x24] sm:$0xf]
    %v128 = vld [vmem:[#allocation5 + $0x28] sm:$0xf]
    %v129 = vld [vmem:[#allocation5 + $0x2c] sm:$0xf]
    %v130 = vld [vmem:[#allocation5 + $0x30] sm:$0xf]
    %v131 = vld [vmem:[#allocation5 + $0x34] sm:$0xf]
    %v132 = vld [vmem:[#allocation5 + $0x38] sm:$0xf]
    %v133 = vld [vmem:[#allocation5 + $0x3c] sm:$0xf]
    %v134 = vld [vmem:[%s4] sm:$0x1]
    %v136 = vlaneseq
    %v137 = vshrl.u32 %v136, 7
    %v138 = vsub.s32 0, %v137
    %v139 = vrot.slane %v134, %v138
    %v157 = vunpack.c.l.b16 %v118
    %v158 = vunpack.c.l.b16 %v119
    %v159 = vunpack.c.l.b16 %v120
    %v160 = vunpack.c.l.b16 %v121
    %v161 = vunpack.c.l.b16 %v122
    %v162 = vunpack.c.l.b16 %v123
    %v163 = vunpack.c.l.b16 %v124
    %v164 = vunpack.c.l.b16 %v125
    %v165 = vunpack.c.l.b16 %v126
    %v166 = vunpack.c.l.b16 %v127
    %v167 = vunpack.c.l.b16 %v128
    %v168 = vunpack.c.l.b16 %v129
    %v169 = vunpack.c.l.b16 %v130
    %v170 = vunpack.c.l.b16 %v131
    %v171 = vunpack.c.l.b16 %v132
    %v172 = vunpack.c.l.b16 %v133
    %v173 = vpack.c.b16 %v158, %v157
    %v174 = vpack.c.b16 %v160, %v159
    %v175 = vpack.c.b16 %v162, %v161
    %v176 = vpack.c.b16 %v164, %v163
    %v177 = vpack.c.b16 %v166, %v165
    %v178 = vpack.c.b16 %v168, %v167
    %v179 = vpack.c.b16 %v170, %v169
    %v180 = vpack.c.b16 %v172, %v171
    %189 = vmatprep.subr.bf16.mxu0 0
    %190 = vmatpush1.bf16.msra.mxu0 %v173
    %191 = vmatprep.subr.bf16.mxu0 0
    %192 = vmatpush1.bf16.msra.mxu0 %v174
    %193 = vmatprep.subr.bf16.mxu0 0
    %194 = vmatpush1.bf16.msra.mxu0 %v175
    %195 = vmatprep.subr.bf16.mxu0 0
    %196 = vmatpush1.bf16.msra.mxu0 %v176
    %197 = vmatprep.subr.bf16.mxu0 0
    %198 = vmatpush1.bf16.msra.mxu0 %v177
    %199 = vmatprep.subr.bf16.mxu0 0
    %200 = vmatpush1.bf16.msra.mxu0 %v178
    %201 = vmatprep.subr.bf16.mxu0 0
    %202 = vmatpush1.bf16.msra.mxu0 %v179
    %203 = vmatprep.subr.bf16.mxu0 0
    %204 = vmatpush1.bf16.msra.mxu0 %v180
    %205 = vmatprep.subr.bf16.mxu0 0
    %206 = vmatpush1.bf16.msra.mxu0 0
    %207 = vmatprep.subr.bf16.mxu0 0
    %208 = vmatpush1.bf16.msra.mxu0 0
    %209 = vmatprep.subr.bf16.mxu0 0
    %210 = vmatpush1.bf16.msra.mxu0 0
    %211 = vmatprep.subr.bf16.mxu0 0
    %212 = vmatpush1.bf16.msra.mxu0 0
    %213 = vmatprep.subr.bf16.mxu0 0
    %214 = vmatpush1.bf16.msra.mxu0 0
    %215 = vmatprep.subr.bf16.mxu0 0
    %216 = vmatpush1.bf16.msra.mxu0 0
    %217 = vmatprep.subr.bf16.mxu0 0
    %218 = vmatpush1.bf16.msra.mxu0 0
    %219 = vmatprep.subr.bf16.mxu0 0
    %220 = vmatpush1.bf16.msra.mxu0 0
    %221 = vmatprep.mubr.bf16.mxu0 0
    %222 = vmatmul.mubr.bf16.gmra.mrb[0].mxu0 %v117
    %v223 = vpop.f32.mrb[0].mxu0
    %v224 = vadd.f32 %v139, %v223
    %v225 = vpop.f32.mrb[0].mxu0
    %v226 = vpop.f32.mrb[0].mxu0
    %v227 = vadd.f32 %v139, %v226
    %v228 = vpop.f32.mrb[0].mxu0
    %229 = vdwg.mxu0
    %v230 = vxor.u32 %v224, 2147483648
    %v231 = vxor.u32 %v227, 2147483648
    %v232 = vmul.f32 %v230, 1.442695
    %v233 = vpow.pop %v232
    %v234 = vmul.f32 %v231, 1.442695
    %v235 = vpow.pop %v234
    %v236 = vadd.f32 %v233, 1.0
    %v237 = vadd.f32 %v235, 1.0
    %v238 = vrcp.pop %v236
    %v239 = vmul.f32 1.0, %v238
    %v240 = vrcp.pop %v237
    %v241 = vmul.f32 1.0, %v240
    %v242 = vmul.f32 %v224, %v239
    %v243 = vmul.f32 %v227, %v241
    %v244 = vpack.c.bf16 %v243, %v242
    %v245 = vld [vmem:[#allocation7] sm:$0xf]
    %v246 = vld [vmem:[#allocation7 + $0x4] sm:$0xf]
    %v247 = vld [vmem:[#allocation7 + $0x8] sm:$0xf]
    %v248 = vld [vmem:[#allocation7 + $0xc] sm:$0xf]
    %v249 = vld [vmem:[#allocation7 + $0x10] sm:$0xf]
    %v250 = vld [vmem:[#allocation7 + $0x14] sm:$0xf]
    %v251 = vld [vmem:[#allocation7 + $0x18] sm:$0xf]
    %v252 = vld [vmem:[#allocation7 + $0x1c] sm:$0xf]
    %v253 = vld [vmem:[#allocation7 + $0x20] sm:$0xf]
    %v254 = vld [vmem:[#allocation7 + $0x24] sm:$0xf]
    %v255 = vld [vmem:[#allocation7 + $0x28] sm:$0xf]
    %v256 = vld [vmem:[#allocation7 + $0x2c] sm:$0xf]
    %v257 = vld [vmem:[#allocation7 + $0x30] sm:$0xf]
    %v258 = vld [vmem:[#allocation7 + $0x34] sm:$0xf]
    %v259 = vld [vmem:[#allocation7 + $0x38] sm:$0xf]
    %v260 = vld [vmem:[#allocation7 + $0x3c] sm:$0xf]
    %v261 = vld [vmem:[%s6] sm:$0x1]
    %v263 = vlaneseq
    %v264 = vshrl.u32 %v263, 7
    %v265 = vsub.s32 0, %v264
    %v266 = vrot.slane %v261, %v265
    %v284 = vunpack.c.l.b16 %v245
    %v285 = vunpack.c.l.b16 %v246
    %v286 = vunpack.c.l.b16 %v247
    %v287 = vunpack.c.l.b16 %v248
    %v288 = vunpack.c.l.b16 %v249
    %v289 = vunpack.c.l.b16 %v250
    %v290 = vunpack.c.l.b16 %v251
    %v291 = vunpack.c.l.b16 %v252
    %v292 = vunpack.c.l.b16 %v253
    %v293 = vunpack.c.l.b16 %v254
    %v294 = vunpack.c.l.b16 %v255
    %v295 = vunpack.c.l.b16 %v256
    %v296 = vunpack.c.l.b16 %v257
    %v297 = vunpack.c.l.b16 %v258
    %v298 = vunpack.c.l.b16 %v259
    %v299 = vunpack.c.l.b16 %v260
    %v300 = vpack.c.b16 %v285, %v284
    %v301 = vpack.c.b16 %v287, %v286
    %v302 = vpack.c.b16 %v289, %v288
    %v303 = vpack.c.b16 %v291, %v290
    %v304 = vpack.c.b16 %v293, %v292
    %v305 = vpack.c.b16 %v295, %v294
    %v306 = vpack.c.b16 %v297, %v296
    %v307 = vpack.c.b16 %v299, %v298
    %316 = vmatprep.subr.bf16.mxu0 0
    %317 = vmatpush1.bf16.msra.mxu0 %v300
    %318 = vmatprep.subr.bf16.mxu0 0
    %319 = vmatpush1.bf16.msra.mxu0 %v301
    %320 = vmatprep.subr.bf16.mxu0 0
    %321 = vmatpush1.bf16.msra.mxu0 %v302
    %322 = vmatprep.subr.bf16.mxu0 0
    %323 = vmatpush1.bf16.msra.mxu0 %v303
    %324 = vmatprep.subr.bf16.mxu0 0
    %325 = vmatpush1.bf16.msra.mxu0 %v304
    %326 = vmatprep.subr.bf16.mxu0 0
    %327 = vmatpush1.bf16.msra.mxu0 %v305
    %328 = vmatprep.subr.bf16.mxu0 0
    %329 = vmatpush1.bf16.msra.mxu0 %v306
    %330 = vmatprep.subr.bf16.mxu0 0
    %331 = vmatpush1.bf16.msra.mxu0 %v307
    %332 = vmatprep.subr.bf16.mxu0 0
    %333 = vmatpush1.bf16.msra.mxu0 0
    %334 = vmatprep.subr.bf16.mxu0 0
    %335 = vmatpush1.bf16.msra.mxu0 0
    %336 = vmatprep.subr.bf16.mxu0 0
    %337 = vmatpush1.bf16.msra.mxu0 0
    %338 = vmatprep.subr.bf16.mxu0 0
    %339 = vmatpush1.bf16.msra.mxu0 0
    %340 = vmatprep.subr.bf16.mxu0 0
    %341 = vmatpush1.bf16.msra.mxu0 0
    %342 = vmatprep.subr.bf16.mxu0 0
    %343 = vmatpush1.bf16.msra.mxu0 0
    %344 = vmatprep.subr.bf16.mxu0 0
    %345 = vmatpush1.bf16.msra.mxu0 0
    %346 = vmatprep.subr.bf16.mxu0 0
    %347 = vmatpush1.bf16.msra.mxu0 0
    %348 = vmatprep.mubr.bf16.mxu0 0
    %349 = vmatmul.mubr.bf16.gmra.mrb[0].mxu0 %v244
    %v350 = vpop.f32.mrb[0].mxu0
    %v351 = vadd.f32 %v266, %v350
    %v352 = vpop.f32.mrb[0].mxu0
    %v353 = vpop.f32.mrb[0].mxu0
    %v354 = vadd.f32 %v266, %v353
    %v355 = vpop.f32.mrb[0].mxu0
    %356 = vdwg.mxu0
    %357 = vst [vmem:[#allocation8] sm:$0xff] %v351
    %358 = vst [vmem:[#allocation8 + $0x8] sm:$0xff] %v354
    // Predicated region
    $region42: #{tpu_custom_call.1} parent=1 // pred_check
      _
    $region43: #{tpu_custom_call.1} parent=1 // pred_check_branch
      %360 = sbr.rel (0) target = $region45
    $region44: #{tpu_custom_call.1} parent=1 // pred_region
      %s362 = ssub.s32 256, 256
      %363 = vsyncadd [#allocation4], %s362
      %s364 = sshll.u32 [#allocation8], 4
      %s365 = int_to_ptr.vmem [resolvable:$true] %s364
      %370 = dma.vmem_to_hbm [thread:$0]  %s365, 256, %s7, [#allocation4], 128, 128, 8
    $region45: #{tpu_custom_call.1} parent=1 // pred_fallthru
      _
    // Predicated region
    $region46: #{tpu_custom_call.1} parent=1 // pred_check
      _
    $region47: #{tpu_custom_call.1} parent=1 // pred_check_branch
      %372 = sbr.rel (0) target = $region49
    $region48: #{tpu_custom_call.1} parent=1 // pred_region
      %373 = dma.done [#allocation4], 256
    $region49: #{tpu_custom_call.1} parent=1 // pred_fallthru
      _
    %374 = vsyncpa [#allocation3], 1
    %375 = vsyncpa [#allocation6], 1
    %376 = vsyncpa [#allocation4], 1

</llo_original>
